<compile_context>
chip_gen: v7x
topology: tpu7x:2x2x1
jax: 0.10.0
libtpu: 0.0.40
codegen_flags: <defaults>
</compile_context>

<pallas_src>
import functools

import jax
import jax.numpy as jnp
from jax.experimental import pallas as pl
from jax.experimental.pallas import tpu as pltpu

GN_EPS = 1e-05
GN_GROUP_SIZE = 32

_HEADROOM_BYTES = 2 << 20  # compiler-internal scratch / misc slack


def _sublane_multiple(dtype) -> int:
    """Minimum sublane multiple for dense packing of `dtype`."""
    return {4: 8, 2: 16, 1: 32}.get(jnp.dtype(dtype).itemsize, 8)


def _vmem_capacity_bytes() -> int:
    """Physical VMEM per TensorCore; conservative fallback (v7x = 64 MiB)."""
    try:
        info = pltpu.get_tpu_info()
        cap = int(getattr(info, "vmem_capacity_bytes", 0) or 0)
        if cap > 0:
            return cap
    except Exception:
        pass
    return 64 << 20


def _divisors_desc(n):
    return [d for d in range(n, 0, -1) if n % d == 0]


# ---------------------------------------------------------------------------
# Single-block path: one (bn samples) x (gpb groups) slab resident in VMEM.
# ---------------------------------------------------------------------------
def _gn_fused_kernel(x_ref, gamma_ref, beta_ref, o_ref):
    """x_ref / o_ref: (bn, gpb, S, L); gamma_ref / beta_ref: (gpb, Sg, Lg).

    The tile is re-read from VMEM for each pass instead of holding one fp32
    copy live across the body (VMEM re-reads are ~free at 3 vld/cycle and this
    halves the peak fp32 working set, which is what lets the big tile fit
    under double-buffering on v7x).
    """
    inv_n = 1.0 / float(x_ref.shape[2] * x_ref.shape[3])

    # Pass 1: per-(sample, group) mean, fp32 accumulation.
    mean = jnp.sum(x_ref[...].astype(jnp.float32), axis=(2, 3), keepdims=True) * inv_n

    # Pass 2: centered (two-pass) variance — avoids E[x^2]-E[x]^2 cancellation.
    d = x_ref[...].astype(jnp.float32) - mean
    var = jnp.sum(d * d, axis=(2, 3), keepdims=True) * inv_n
    inv_std = jax.lax.rsqrt(var + GN_EPS)

    # Fold normalization + affine into a single multiply-add.
    a = gamma_ref[...].astype(jnp.float32)[None] * inv_std   # (bn, gpb, S*, L*)
    b = beta_ref[...].astype(jnp.float32)[None] - mean * a

    # Pass 3: one fused store pass over the tile.
    o_ref[...] = (x_ref[...].astype(jnp.float32) * a + b).astype(o_ref.dtype)


# ---------------------------------------------------------------------------
# Split-reduction fallback (group does not fit in VMEM): chunked HW axis.
# ---------------------------------------------------------------------------
def _gn_stats_kernel(x_ref, mean_ref, istd_ref, s1_ref, s2_ref, *, hw, inv_count):
    """Chunked sum / sum-of-squares over HW; finalize mean & inv_std.

    x_ref: (1, 1, cpg, hw_chunk); mean_ref / istd_ref: (1, 1, 1, 1);
    s1_ref / s2_ref: (1, 1) fp32 VMEM scratch accumulators.
    """
    k = pl.program_id(2)

    @pl.when(k == 0)
    def _():
        s1_ref[...] = jnp.zeros_like(s1_ref)
        s2_ref[...] = jnp.zeros_like(s2_ref)

    # Mask the (possibly partial) last chunk: padded reads are undefined.
    col = jax.lax.broadcasted_iota(jnp.int32, x_ref.shape, 3) + k * x_ref.shape[3]
    xm = jnp.where(col < hw, x_ref[...].astype(jnp.float32), 0.0)

    s1_ref[...] += jnp.sum(xm, axis=(2, 3), keepdims=True).reshape(1, 1)
    s2_ref[...] += jnp.sum(xm * xm, axis=(2, 3), keepdims=True).reshape(1, 1)

    @pl.when(k == pl.num_programs(2) - 1)
    def _():
        # Single-pass variance here (chunks are streamed once); fp32 accum.
        mean = s1_ref[...] * inv_count
        var = jnp.maximum(s2_ref[...] * inv_count - mean * mean, 0.0)
        mean_ref[...] = mean.reshape(1, 1, 1, 1)
        istd_ref[...] = jax.lax.rsqrt(var + GN_EPS).reshape(1, 1, 1, 1)


def _gn_apply_kernel(x_ref, gamma_ref, beta_ref, mean_ref, istd_ref, o_ref):
    """Chunked fused normalize + affine: y = x * a + b.

    x_ref / o_ref: (1, 1, cpg, hw_chunk); gamma_ref / beta_ref: (1, cpg, 1);
    mean_ref / istd_ref: (1, 1, 1, 1).  Out-of-bounds writes of a partial last
    chunk are dropped by Pallas.
    """
    a = gamma_ref[...].astype(jnp.float32)[None] * istd_ref[...]   # (1,1,cpg,1)
    b = beta_ref[...].astype(jnp.float32)[None] - mean_ref[...] * a
    o_ref[...] = (x_ref[...].astype(jnp.float32) * a + b).astype(o_ref.dtype)


# ---------------------------------------------------------------------------
# Wrapper
# ---------------------------------------------------------------------------
def group_norm(x, gamma, beta, *, block_bytes_cap=None):
    """GroupNorm forward (num_groups = max(1, C // 32), eps = 1e-5).

    x:     (N, C, H, W)
    gamma: (C,) per-channel scale
    beta:  (C,) per-channel shift
    block_bytes_cap: optional cap on the per-step x-tile bytes (mainly to
        exercise the split-reduction path on small test inputs).
    """
    N, C, H, W = x.shape
    G = max(1, C // GN_GROUP_SIZE)
    assert C % G == 0, "channels must be divisible by num_groups"
    cpg = C // G
    HW = H * W

    x_item = jnp.dtype(x.dtype).itemsize
    g_item = jnp.dtype(gamma.dtype).itemsize

    cap = _vmem_capacity_bytes()
    # Generation-aware scoped-VMEM request: ~60% of physical, clamped 16..96 MiB
    # (v6e/v5e: ~77 MiB of 128; v7x: ~38 MiB of 64).
    vmem_limit = max(min(int(cap * 0.6), 96 << 20), 16 << 20)

    # ---- lane-dense layout selection ---------------------------------------
    # Path A: keep (cpg, HW) as (sublane, lane) when both are dtype-dense.
    # Path B: collapse the group to one lane axis; gamma/beta pre-broadcast
    #         (tiny one-time cost, keeps every step at full 128-lane stores).
    use_path_a = (HW % 128 == 0) and (cpg % _sublane_multiple(x.dtype) == 0)
    if use_path_a:
        S, L = cpg, HW
        x4 = x.reshape(N, G, cpg, HW)
        gamma3 = gamma.reshape(G, cpg, 1)
        beta3 = beta.reshape(G, cpg, 1)
    else:
        S, L = 1, cpg * HW
        x4 = x.reshape(N, G, 1, cpg * HW)
        gamma3 = jnp.broadcast_to(
            gamma.reshape(G, cpg, 1), (G, cpg, HW)).reshape(G, 1, cpg * HW)
        beta3 = jnp.broadcast_to(
            beta.reshape(G, cpg, 1), (G, cpg, HW)).reshape(G, 1, cpg * HW)
    Sg, Lg = gamma3.shape[1], gamma3.shape[2]

    # ---- (bn, gpb) fusion search with honest VMEM accounting ----------------
    def need_bytes(bn, gpb):
        x_tile = bn * gpb * S * L * x_item      # input tile
        o_tile = x_tile                          # output tile
        g_tile = gpb * Sg * Lg * g_item          # gamma / beta tiles
        f32_work = 2 * bn * gpb * S * L * 4      # in-body fp32 temporaries
        #        in dbuf      out dbuf     2 arrays x 2 bufs
        return 2 * x_tile + 2 * o_tile + 4 * g_tile + f32_work + _HEADROOM_BYTES

    best = None
    for gpb in _divisors_desc(G):
        for bn in _divisors_desc(N):
            x_tile = bn * gpb * S * L * x_item
            if block_bytes_cap is not None and x_tile > block_bytes_cap:
                continue
            if need_bytes(bn, gpb) > vmem_limit:
                continue
            if best is None or bn * gpb > best[0]:
                best = (bn * gpb, bn, gpb)

    if best is not None:
        _, bn, gpb = best
        grid = (N // bn, G // gpb)
        out4 = pl.pallas_call(
            _gn_fused_kernel,
            out_shape=jax.ShapeDtypeStruct(x4.shape, x.dtype),
            grid_spec=pltpu.PrefetchScalarGridSpec(
                num_scalar_prefetch=0,
                grid=grid,
                in_specs=[
                    pl.BlockSpec((bn, gpb, S, L), lambda b, g: (b, g, 0, 0)),
                    pl.BlockSpec((gpb, Sg, Lg), lambda b, g: (g, 0, 0)),
                    pl.BlockSpec((gpb, Sg, Lg), lambda b, g: (g, 0, 0)),
                ],
                out_specs=pl.BlockSpec((bn, gpb, S, L), lambda b, g: (b, g, 0, 0)),
            ),
            compiler_params=pltpu.CompilerParams(
                dimension_semantics=("parallel", "parallel"),
                vmem_limit_bytes=vmem_limit,
            ),
        )(x4, gamma3, beta3)
        return out4.reshape(N, C, H, W)

    # ---- split-reduction fallback: group too large for one resident block --
    # Two streamed passes over HBM: (1) chunked stats -> per-(n, g) mean and
    # inv_std, (2) chunked normalize + affine.  HW (lane) axis is tiled in
    # 128-aligned chunks; the partial last chunk is masked for the stats and
    # its out-of-bounds writes are dropped for the apply.
    x4 = x.reshape(N, G, cpg, HW)
    gamma3 = gamma.reshape(G, cpg, 1)
    beta3 = beta.reshape(G, cpg, 1)

    chunk_cap = (vmem_limit - _HEADROOM_BYTES) // 12
    if block_bytes_cap is not None:
        chunk_cap = min(chunk_cap, block_bytes_cap)
    hw_chunk = max(128, (chunk_cap // (cpg * x_item)) // 128 * 128)
    hw_chunk = min(hw_chunk, pl.cdiv(HW, 128) * 128)
    n_chunks = pl.cdiv(HW, hw_chunk)
    grid = (N, G, n_chunks)

    stats_kernel = functools.partial(
        _gn_stats_kernel, hw=HW, inv_count=1.0 / float(cpg * HW))
    mean, istd = pl.pallas_call(
        stats_kernel,
        out_shape=(jax.ShapeDtypeStruct((N, G, 1, 1), jnp.float32),
                   jax.ShapeDtypeStruct((N, G, 1, 1), jnp.float32)),
        grid_spec=pltpu.PrefetchScalarGridSpec(
            num_scalar_prefetch=0,
            grid=grid,
            in_specs=[
                pl.BlockSpec((1, 1, cpg, hw_chunk), lambda n, g, k: (n, g, 0, k)),
            ],
            out_specs=[
                pl.BlockSpec((1, 1, 1, 1), lambda n, g, k: (n, g, 0, 0)),
                pl.BlockSpec((1, 1, 1, 1), lambda n, g, k: (n, g, 0, 0)),
            ],
            scratch_shapes=[pltpu.VMEM((1, 1), jnp.float32),
                            pltpu.VMEM((1, 1), jnp.float32)],
        ),
        compiler_params=pltpu.CompilerParams(
            dimension_semantics=("parallel", "parallel", "arbitrary"),
            vmem_limit_bytes=vmem_limit,
        ),
    )(x4)

    out4 = pl.pallas_call(
        _gn_apply_kernel,
        out_shape=jax.ShapeDtypeStruct(x4.shape, x.dtype),
        grid_spec=pltpu.PrefetchScalarGridSpec(
            num_scalar_prefetch=0,
            grid=grid,
            in_specs=[
                pl.BlockSpec((1, 1, cpg, hw_chunk), lambda n, g, k: (n, g, 0, k)),
                pl.BlockSpec((1, cpg, 1), lambda n, g, k: (g, 0, 0)),
                pl.BlockSpec((1, cpg, 1), lambda n, g, k: (g, 0, 0)),
                pl.BlockSpec((1, 1, 1, 1), lambda n, g, k: (n, g, 0, 0)),
                pl.BlockSpec((1, 1, 1, 1), lambda n, g, k: (n, g, 0, 0)),
            ],
            out_specs=pl.BlockSpec((1, 1, cpg, hw_chunk),
                                   lambda n, g, k: (n, g, 0, k)),
        ),
        compiler_params=pltpu.CompilerParams(
            dimension_semantics=("parallel", "parallel", "arbitrary"),
            vmem_limit_bytes=vmem_limit,
        ),
    )(x4, gamma3, beta3, mean, istd)
    return out4.reshape(N, C, H, W)


def group_norm_ref(x, gamma, beta):
    """Plain-JAX reference matching torch.nn.GroupNorm semantics."""
    N, C, H, W = x.shape
    G = max(1, C // GN_GROUP_SIZE)
    cpg = C // G
    xg = x.reshape(N, G, cpg, H, W).astype(jnp.float32)
    mean = xg.mean(axis=(2, 3, 4), keepdims=True)
    var = ((xg - mean) ** 2).mean(axis=(2, 3, 4), keepdims=True)
    xn = ((xg - mean) / jnp.sqrt(var + GN_EPS)).reshape(N, C, H, W)
    return (xn * gamma.reshape(1, C, 1, 1) + beta.reshape(1, C, 1, 1)).astype(x.dtype)


if __name__ == "__main__":
    key = jax.random.PRNGKey(0)
    kx, kg, kb = jax.random.split(key, 3)

    # Shapes implied by the module: in_channels=4 -> num_groups = max(1, 4//32) = 1.
    N, C, H, W = 2, 4, 16, 16
    x = jax.random.normal(kx, (N, C, H, W), dtype=jnp.float32)
    gamma = 1.0 + 0.1 * jax.random.normal(kg, (C,), dtype=jnp.float32)
    beta = 0.1 * jax.random.normal(kb, (C,), dtype=jnp.float32)

    # Primary run (collapsed lane-dense layout, whole problem in one block).
    out = jax.block_until_ready(group_norm(x, gamma, beta))
    ref = group_norm_ref(x, gamma, beta)
    assert jnp.allclose(out, ref, atol=1e-5, rtol=1e-5), (
        f"fused (collapsed) path max abs err {jnp.max(jnp.abs(out - ref))}")

    # (cpg, HW) sublane/lane layout path (C=32 -> one dense group of 32 channels).
    C2 = 32
    x2 = jax.random.normal(kx, (N, C2, H, W), dtype=jnp.float32)
    g2 = 1.0 + 0.1 * jax.random.normal(kg, (C2,), dtype=jnp.float32)
    b2 = 0.1 * jax.random.normal(kb, (C2,), dtype=jnp.float32)
    out2 = jax.block_until_ready(group_norm(x2, g2, b2))
    ref2 = group_norm_ref(x2, g2, b2)
    assert jnp.allclose(out2, ref2, atol=1e-5, rtol=1e-5), (
        f"fused (4-D) path max abs err {jnp.max(jnp.abs(out2 - ref2))}")

    # Split-reduction fallback, forced small; HW=400 exercises the partial-chunk mask.
    H3 = W3 = 20
    x3 = jax.random.normal(kx, (N, C, H3, W3), dtype=jnp.float32)
    out3 = jax.block_until_ready(group_norm(x3, gamma, beta, block_bytes_cap=3000))
    ref3 = group_norm_ref(x3, gamma, beta)
    assert jnp.allclose(out3, ref3, atol=1e-5, rtol=1e-5), (
        f"split path max abs err {jnp.max(jnp.abs(out3 - ref3))}")

    # bf16 input sanity check (stats in fp32, output cast back to bf16).
    xb = x.astype(jnp.bfloat16)
    outb = jax.block_until_ready(group_norm(xb, gamma, beta)).astype(jnp.float32)
    refb = group_norm_ref(xb, gamma, beta).astype(jnp.float32)
    assert jnp.allclose(outb, refb, atol=5e-2, rtol=5e-2), (
        f"bf16 path max abs err {jnp.max(jnp.abs(outb - refb))}")

    print("KERNEL_OK")
</pallas_src>

<mosaic_0001>
module attributes {stable_mosaic.version = 11 : i64} {
  func.func @_gn_fused_kernel(%arg0: i32, %arg1: i32, %arg2: memref<2x1x1x1024xf32, #tpu.memory_space<vmem>>, %arg3: memref<1x1x1024xf32, #tpu.memory_space<vmem>>, %arg4: memref<1x1x1024xf32, #tpu.memory_space<vmem>>, %arg5: memref<2x1x1x1024xf32, #tpu.memory_space<vmem>>) attributes {dimension_semantics = [#tpu.dimension_semantics<parallel>, #tpu.dimension_semantics<parallel>], iteration_bounds = array<i64: 1, 1>, scalar_prefetch = 0 : i64, scratch_operands = 0 : i64, tpu.core_type = #tpu.core_type<tc>, window_params = [{transform_indices = @transform_0, window_bounds = array<i64: 2, 1, 1, 1024>}, {transform_indices = @transform_1, window_bounds = array<i64: 1, 1, 1024>}, {transform_indices = @transform_2, window_bounds = array<i64: 1, 1, 1024>}, {transform_indices = @transform_3, window_bounds = array<i64: 2, 1, 1, 1024>}]} {
    %c0 = arith.constant 0 : index
    %c0_0 = arith.constant 0 : index
    %c0_1 = arith.constant 0 : index
    %c0_2 = arith.constant 0 : index
    %0 = vector.load %arg2[%c0, %c0_0, %c0_1, %c0_2] : memref<2x1x1x1024xf32, #tpu.memory_space<vmem>>, vector<2x1x1x1024xf32>
    %cst = arith.constant dense<0.000000e+00> : vector<2x1xf32>
    %1 = vector.multi_reduction <add>, %0, %cst [2, 3] : vector<2x1x1x1024xf32> to vector<2x1xf32>
    %2 = vector.shape_cast %1 : vector<2x1xf32> to vector<2x1x1x1xf32>
    %cst_3 = arith.constant 9.765625E-4 : f32
    %3 = vector.broadcast %cst_3 : f32 to vector<2x1x1x1xf32>
    %4 = arith.mulf %2, %3 : vector<2x1x1x1xf32>
    %c0_4 = arith.constant 0 : index
    %c0_5 = arith.constant 0 : index
    %c0_6 = arith.constant 0 : index
    %c0_7 = arith.constant 0 : index
    %5 = vector.load %arg2[%c0_4, %c0_5, %c0_6, %c0_7] : memref<2x1x1x1024xf32, #tpu.memory_space<vmem>>, vector<2x1x1x1024xf32>
    %6 = vector.broadcast %4 : vector<2x1x1x1xf32> to vector<2x1x1x1024xf32>
    %7 = arith.subf %5, %6 : vector<2x1x1x1024xf32>
    %8 = arith.mulf %7, %7 : vector<2x1x1x1024xf32>
    %cst_8 = arith.constant dense<0.000000e+00> : vector<2x1xf32>
    %9 = vector.multi_reduction <add>, %8, %cst_8 [2, 3] : vector<2x1x1x1024xf32> to vector<2x1xf32>
    %10 = vector.shape_cast %9 : vector<2x1xf32> to vector<2x1x1x1xf32>
    %cst_9 = arith.constant 9.765625E-4 : f32
    %11 = vector.broadcast %cst_9 : f32 to vector<2x1x1x1xf32>
    %12 = arith.mulf %10, %11 : vector<2x1x1x1xf32>
    %cst_10 = arith.constant 9.99999974E-6 : f32
    %13 = vector.broadcast %cst_10 : f32 to vector<2x1x1x1xf32>
    %14 = arith.addf %12, %13 : vector<2x1x1x1xf32>
    %15 = math.rsqrt %14 : vector<2x1x1x1xf32>
    %c0_11 = arith.constant 0 : index
    %c0_12 = arith.constant 0 : index
    %c0_13 = arith.constant 0 : index
    %16 = vector.load %arg3[%c0_11, %c0_12, %c0_13] : memref<1x1x1024xf32, #tpu.memory_space<vmem>>, vector<1x1x1024xf32>
    %17 = vector.shape_cast %16 : vector<1x1x1024xf32> to vector<1x1x1x1024xf32>
    %18 = vector.broadcast %17 : vector<1x1x1x1024xf32> to vector<2x1x1x1024xf32>
    %19 = vector.broadcast %15 : vector<2x1x1x1xf32> to vector<2x1x1x1024xf32>
    %20 = arith.mulf %18, %19 : vector<2x1x1x1024xf32>
    %c0_14 = arith.constant 0 : index
    %c0_15 = arith.constant 0 : index
    %c0_16 = arith.constant 0 : index
    %21 = vector.load %arg4[%c0_14, %c0_15, %c0_16] : memref<1x1x1024xf32, #tpu.memory_space<vmem>>, vector<1x1x1024xf32>
    %22 = vector.shape_cast %21 : vector<1x1x1024xf32> to vector<1x1x1x1024xf32>
    %23 = vector.broadcast %4 : vector<2x1x1x1xf32> to vector<2x1x1x1024xf32>
    %24 = arith.mulf %23, %20 : vector<2x1x1x1024xf32>
    %25 = vector.broadcast %22 : vector<1x1x1x1024xf32> to vector<2x1x1x1024xf32>
    %26 = arith.subf %25, %24 : vector<2x1x1x1024xf32>
    %c0_17 = arith.constant 0 : index
    %c0_18 = arith.constant 0 : index
    %c0_19 = arith.constant 0 : index
    %c0_20 = arith.constant 0 : index
    %27 = vector.load %arg2[%c0_17, %c0_18, %c0_19, %c0_20] : memref<2x1x1x1024xf32, #tpu.memory_space<vmem>>, vector<2x1x1x1024xf32>
    %28 = arith.mulf %27, %20 : vector<2x1x1x1024xf32>
    %29 = arith.addf %28, %26 : vector<2x1x1x1024xf32>
    %c0_21 = arith.constant 0 : index
    %c0_22 = arith.constant 0 : index
    %c0_23 = arith.constant 0 : index
    %c0_24 = arith.constant 0 : index
    %30 = vector.load %arg5[%c0_21, %c0_22, %c0_23, %c0_24] : memref<2x1x1x1024xf32, #tpu.memory_space<vmem>>, vector<2x1x1x1024xf32>
    tpu.vector_store %arg5[%c0_21, %c0_22, %c0_23, %c0_24], %29 {strides = array<i32>} : memref<2x1x1x1024xf32, #tpu.memory_space<vmem>>, vector<2x1x1x1024xf32>,
    return
  }
  func.func @transform_0(%arg0: i32, %arg1: i32) -> (i32, i32, i32, i32) {
    %c0_i32 = arith.constant 0 : i32
    %c0_i32_0 = arith.constant 0 : i32
    %c0_i32_1 = arith.constant 0 : i32
    return %arg0, %arg1, %c0_i32, %c0_i32_0 : i32, i32, i32, i32
  }
  func.func @transform_1(%arg0: i32, %arg1: i32) -> (i32, i32, i32) {
    %c0_i32 = arith.constant 0 : i32
    %c0_i32_0 = arith.constant 0 : i32
    %c0_i32_1 = arith.constant 0 : i32
    return %arg1, %c0_i32, %c0_i32_0 : i32, i32, i32
  }
  func.func @transform_2(%arg0: i32, %arg1: i32) -> (i32, i32, i32) {
    %c0_i32 = arith.constant 0 : i32
    %c0_i32_0 = arith.constant 0 : i32
    %c0_i32_1 = arith.constant 0 : i32
    return %arg1, %c0_i32, %c0_i32_0 : i32, i32, i32
  }
  func.func @transform_3(%arg0: i32, %arg1: i32) -> (i32, i32, i32, i32) {
    %c0_i32 = arith.constant 0 : i32
    %c0_i32_0 = arith.constant 0 : i32
    %c0_i32_1 = arith.constant 0 : i32
    return %arg0, %arg1, %c0_i32, %c0_i32_0 : i32, i32, i32, i32
  }
}

</mosaic_0001>

<llo_original>
// kernel: tpu_custom_call.1
$region0: #{tpu_custom_call.1}
  #allocation0 [shape = 'u32[]', space=smem, size = 0x4, offset = 0x4, fixed_abs, tag = 'smem constant byte address 0x4 - core index']
  #allocation1 [shape = 'u32[144,128]{1,0:T(1,128)}', space=vmem, size = 0x12000, scoped, tag = 'internal scratch']
  %s0 = inlined_call_operand.hbm [shape: f32[2,1,1,1024], index: 0, kind: input, shape index: {}]
  %s1 = inlined_call_operand.hbm [shape: f32[1,1,1024], index: 1, kind: input, shape index: {}]
  %s2 = inlined_call_operand.hbm [shape: f32[1,1,1024], index: 2, kind: input, shape index: {}]
  %s3 = inlined_call_operand.hbm [shape: f32[2,1,1,1024], index: 3, kind: output, shape index: {}]
  %s4 = sld [smem:[#allocation0]]
  $region34: #{tpu_custom_call.1} parent=0
    _
  %s6 = ssub.s32 1, %s4
  %s7 = scalar_select 0, %s6, %s4
  $region1: #{tpu_custom_call.1} parent=0
    #allocation2 [shape = 'u8[8192]{0}', space=vmem, size = 0x2000, scoped, tag = 'input window, operand 0, single buffered']
    #allocation3 [shape = 's32[1]{0}', space=sflag, size = 0x4, scoped, tag = 'scoped memory for tpu_custom_call.1']
    #allocation4 [shape = 's32[1]{0}', space=sflag, size = 0x4, scoped, tag = 'scoped memory for tpu_custom_call.1']
    #allocation5 [shape = 'u8[4096]{0}', space=vmem, size = 0x1000, scoped, tag = 'input window, operand 1, single buffered']
    #allocation6 [shape = 's32[1]{0}', space=sflag, size = 0x4, scoped, tag = 'scoped memory for tpu_custom_call.1']
    #allocation7 [shape = 'u8[4096]{0}', space=vmem, size = 0x1000, scoped, tag = 'input window, operand 2, single buffered']
    #allocation8 [shape = 'u8[8192]{0}', space=vmem, size = 0x2000, scoped, tag = 'output window, operand 0, single buffered']
    %8 = vsyncpa [#allocation3], 0
    %9 = vsyncpa [#allocation6], 0
    %10 = vsyncpa [#allocation4], 0
    // Predicated region
    $region2: #{tpu_custom_call.1} parent=1 // pred_check
      _
    $region3: #{tpu_custom_call.1} parent=1 // pred_check_branch
      %12 = sbr.rel (0) target = $region5
    $region4: #{tpu_custom_call.1} parent=1 // pred_region
      %s14 = ssub.s32 256, 256
      %15 = vsyncadd [#allocation3], %s14
      %s16 = sshll.u32 [#allocation2], 4
      %s17 = int_to_ptr.vmem [resolvable:$true] %s16
      %22 = dma.hbm_to_vmem [thread:$0]  %s0, 256, %s17, [#allocation3], 128, 128, 8
    $region5: #{tpu_custom_call.1} parent=1 // pred_fallthru
      _
    // Predicated region
    $region6: #{tpu_custom_call.1} parent=1 // pred_check
      _
    $region7: #{tpu_custom_call.1} parent=1 // pred_check_branch
      %24 = sbr.rel (0) target = $region9
    $region8: #{tpu_custom_call.1} parent=1 // pred_region
      %s26 = ssub.s32 128, 128
      %27 = vsyncadd [#allocation6], %s26
      %s29 = sshll.u32 [#allocation5], 4
      %s30 = int_to_ptr.vmem [resolvable:$true] %s29
      %32 = dma.hbm_to_vmem [thread:$0]  %s1, 128, %s30, [#allocation6]
    $region9: #{tpu_custom_call.1} parent=1 // pred_fallthru
      _
    // Predicated region
    $region10: #{tpu_custom_call.1} parent=1 // pred_check
      _
    $region11: #{tpu_custom_call.1} parent=1 // pred_check_branch
      %34 = sbr.rel (0) target = $region13
    $region12: #{tpu_custom_call.1} parent=1 // pred_region
      %s36 = ssub.s32 128, 128
      %37 = vsyncadd [#allocation6], %s36
      %s39 = sshll.u32 [#allocation7], 4
      %s40 = int_to_ptr.vmem [resolvable:$true] %s39
      %42 = dma.hbm_to_vmem [thread:$0]  %s2, 128, %s40, [#allocation6]
    $region13: #{tpu_custom_call.1} parent=1 // pred_fallthru
      _
    // Predicated region
    $region14: #{tpu_custom_call.1} parent=1 // pred_check
      _
    $region15: #{tpu_custom_call.1} parent=1 // pred_check_branch
      %44 = sbr.rel (0) target = $region17
    $region16: #{tpu_custom_call.1} parent=1 // pred_region
      %45 = dma.done [#allocation3], 256
    $region17: #{tpu_custom_call.1} parent=1 // pred_fallthru
      _
    // Predicated region
    $region18: #{tpu_custom_call.1} parent=1 // pred_check
      _
    $region19: #{tpu_custom_call.1} parent=1 // pred_check_branch
      %47 = sbr.rel (0) target = $region21
    $region20: #{tpu_custom_call.1} parent=1 // pred_region
      %48 = dma.done [#allocation6], 128
    $region21: #{tpu_custom_call.1} parent=1 // pred_fallthru
      _
    // Predicated region
    $region22: #{tpu_custom_call.1} parent=1 // pred_check
      _
    $region23: #{tpu_custom_call.1} parent=1 // pred_check_branch
      %50 = sbr.rel (0) target = $region25
    $region24: #{tpu_custom_call.1} parent=1 // pred_region
      %51 = dma.done [#allocation6], 128
    $region25: #{tpu_custom_call.1} parent=1 // pred_fallthru
      _
    %v52 = vld [vmem:[#allocation2] sm:$0xff]
    %v53 = vld [vmem:[#allocation2 + $0x8] sm:$0xff]
    %v56 = vlaneseq
    %v57 = vshrl.u32 %v56, 7
    %v58 = vsub.s32 0, %v57
    %v59 = vrot.slane %v52, %v58
    %v60 = vlaneseq
    %v61 = vshrl.u32 %v60, 7
    %v62 = vsub.s32 1, %v61
    %v63 = vrot.slane %v52, %v62
    %v64 = vlaneseq
    %v65 = vshrl.u32 %v64, 7
    %v66 = vsub.s32 2, %v65
    %v67 = vrot.slane %v52, %v66
    %v68 = vlaneseq
    %v69 = vshrl.u32 %v68, 7
    %v70 = vsub.s32 3, %v69
    %v71 = vrot.slane %v52, %v70
    %v72 = vlaneseq
    %v73 = vshrl.u32 %v72, 7
    %v74 = vsub.s32 4, %v73
    %v75 = vrot.slane %v52, %v74
    %v76 = vlaneseq
    %v77 = vshrl.u32 %v76, 7
    %v78 = vsub.s32 5, %v77
    %v79 = vrot.slane %v52, %v78
    %v80 = vlaneseq
    %v81 = vshrl.u32 %v80, 7
    %v82 = vsub.s32 6, %v81
    %v83 = vrot.slane %v52, %v82
    %v84 = vlaneseq
    %v85 = vshrl.u32 %v84, 7
    %v86 = vsub.s32 7, %v85
    %v87 = vrot.slane %v52, %v86
    %v88 = vlaneseq
    %v89 = vshrl.u32 %v88, 7
    %v90 = vsub.s32 0, %v89
    %v91 = vrot.slane %v53, %v90
    %v92 = vlaneseq
    %v93 = vshrl.u32 %v92, 7
    %v94 = vsub.s32 1, %v93
    %v95 = vrot.slane %v53, %v94
    %v96 = vlaneseq
    %v97 = vshrl.u32 %v96, 7
    %v98 = vsub.s32 2, %v97
    %v99 = vrot.slane %v53, %v98
    %v100 = vlaneseq
    %v101 = vshrl.u32 %v100, 7
    %v102 = vsub.s32 3, %v101
    %v103 = vrot.slane %v53, %v102
    %v104 = vlaneseq
    %v105 = vshrl.u32 %v104, 7
    %v106 = vsub.s32 4, %v105
    %v107 = vrot.slane %v53, %v106
    %v108 = vlaneseq
    %v109 = vshrl.u32 %v108, 7
    %v110 = vsub.s32 5, %v109
    %v111 = vrot.slane %v53, %v110
    %v112 = vlaneseq
    %v113 = vshrl.u32 %v112, 7
    %v114 = vsub.s32 6, %v113
    %v115 = vrot.slane %v53, %v114
    %v116 = vlaneseq
    %v117 = vshrl.u32 %v116, 7
    %v118 = vsub.s32 7, %v117
    %v119 = vrot.slane %v53, %v118
    %vm136 = vcmask 1040384
    %v137 = vsel %vm136, %v59, 0.0
    %v138 = vsel %vm136, %v63, 0.0
    %v139 = vadd.f32 %v137, %v138
    %v140 = vsel %vm136, %v67, 0.0
    %v141 = vadd.f32 %v139, %v140
    %v142 = vsel %vm136, %v71, 0.0
    %v143 = vadd.f32 %v141, %v142
    %v144 = vsel %vm136, %v75, 0.0
    %v145 = vadd.f32 %v143, %v144
    %v146 = vsel %vm136, %v79, 0.0
    %v147 = vadd.f32 %v145, %v146
    %v148 = vsel %vm136, %v83, 0.0
    %v149 = vadd.f32 %v147, %v148
    %v150 = vsel %vm136, %v87, 0.0
    %v151 = vadd.f32 %v149, %v150
    %152 = vadd.xlane.f32.xlu0 %v151
    %v153 = vpop.xlane.xlu0 %152
    %v154 = vrot.slane %v153, 4
    %v155 = vadd.f32 %v153, %v154
    %v156 = vrot.slane %v155, 2
    %v157 = vadd.f32 %v155, %v156
    %v158 = vrot.slane %v157, 1
    %v159 = vadd.f32 %v157, %v158
    %v160 = vsel %vm136, %v91, 0.0
    %v161 = vsel %vm136, %v95, 0.0
    %v162 = vadd.f32 %v160, %v161
    %v163 = vsel %vm136, %v99, 0.0
    %v164 = vadd.f32 %v162, %v163
    %v165 = vsel %vm136, %v103, 0.0
    %v166 = vadd.f32 %v164, %v165
    %v167 = vsel %vm136, %v107, 0.0
    %v168 = vadd.f32 %v166, %v167
    %v169 = vsel %vm136, %v111, 0.0
    %v170 = vadd.f32 %v168, %v169
    %v171 = vsel %vm136, %v115, 0.0
    %v172 = vadd.f32 %v170, %v171
    %v173 = vsel %vm136, %v119, 0.0
    %v174 = vadd.f32 %v172, %v173
    %175 = vadd.xlane.f32.xlu0 %v174
    %v176 = vpop.xlane.xlu0 %175
    %v177 = vrot.slane %v176, 4
    %v178 = vadd.f32 %v176, %v177
    %v179 = vrot.slane %v178, 2
    %v180 = vadd.f32 %v178, %v179
    %v181 = vrot.slane %v180, 1
    %v182 = vadd.f32 %v180, %v181
    %v183 = vmul.f32 %v159, 0.0009765625
    %v184 = vmul.f32 %v182, 0.0009765625
    %v185 = vsub.f32 %v52, %v183
    %v186 = vsub.f32 %v53, %v184
    %v187 = vmul.f32 %v185, %v185
    %v188 = vmul.f32 %v186, %v186
    %v191 = vlaneseq
    %v192 = vshrl.u32 %v191, 7
    %v193 = vsub.s32 0, %v192
    %v194 = vrot.slane %v187, %v193
    %v195 = vlaneseq
    %v196 = vshrl.u32 %v195, 7
    %v197 = vsub.s32 1, %v196
    %v198 = vrot.slane %v187, %v197
    %v199 = vlaneseq
    %v200 = vshrl.u32 %v199, 7
    %v201 = vsub.s32 2, %v200
    %v202 = vrot.slane %v187, %v201
    %v203 = vlaneseq
    %v204 = vshrl.u32 %v203, 7
    %v205 = vsub.s32 3, %v204
    %v206 = vrot.slane %v187, %v205
    %v207 = vlaneseq
    %v208 = vshrl.u32 %v207, 7
    %v209 = vsub.s32 4, %v208
    %v210 = vrot.slane %v187, %v209
    %v211 = vlaneseq
    %v212 = vshrl.u32 %v211, 7
    %v213 = vsub.s32 5, %v212
    %v214 = vrot.slane %v187, %v213
    %v215 = vlaneseq
    %v216 = vshrl.u32 %v215, 7
    %v217 = vsub.s32 6, %v216
    %v218 = vrot.slane %v187, %v217
    %v219 = vlaneseq
    %v220 = vshrl.u32 %v219, 7
    %v221 = vsub.s32 7, %v220
    %v222 = vrot.slane %v187, %v221
    %v223 = vlaneseq
    %v224 = vshrl.u32 %v223, 7
    %v225 = vsub.s32 0, %v224
    %v226 = vrot.slane %v188, %v225
    %v227 = vlaneseq
    %v228 = vshrl.u32 %v227, 7
    %v229 = vsub.s32 1, %v228
    %v230 = vrot.slane %v188, %v229
    %v231 = vlaneseq
    %v232 = vshrl.u32 %v231, 7
    %v233 = vsub.s32 2, %v232
    %v234 = vrot.slane %v188, %v233
    %v235 = vlaneseq
    %v236 = vshrl.u32 %v235, 7
    %v237 = vsub.s32 3, %v236
    %v238 = vrot.slane %v188, %v237
    %v239 = vlaneseq
    %v240 = vshrl.u32 %v239, 7
    %v241 = vsub.s32 4, %v240
    %v242 = vrot.slane %v188, %v241
    %v243 = vlaneseq
    %v244 = vshrl.u32 %v243, 7
    %v245 = vsub.s32 5, %v244
    %v246 = vrot.slane %v188, %v245
    %v247 = vlaneseq
    %v248 = vshrl.u32 %v247, 7
    %v249 = vsub.s32 6, %v248
    %v250 = vrot.slane %v188, %v249
    %v251 = vlaneseq
    %v252 = vshrl.u32 %v251, 7
    %v253 = vsub.s32 7, %v252
    %v254 = vrot.slane %v188, %v253
    %v271 = vsel %vm136, %v194, 0.0
    %v272 = vsel %vm136, %v198, 0.0
    %v273 = vadd.f32 %v271, %v272
    %v274 = vsel %vm136, %v202, 0.0
    %v275 = vadd.f32 %v273, %v274
    %v276 = vsel %vm136, %v206, 0.0
    %v277 = vadd.f32 %v275, %v276
    %v278 = vsel %vm136, %v210, 0.0
    %v279 = vadd.f32 %v277, %v278
    %v280 = vsel %vm136, %v214, 0.0
    %v281 = vadd.f32 %v279, %v280
    %v282 = vsel %vm136, %v218, 0.0
    %v283 = vadd.f32 %v281, %v282
    %v284 = vsel %vm136, %v222, 0.0
    %v285 = vadd.f32 %v283, %v284
    %286 = vadd.xlane.f32.xlu0 %v285
    %v287 = vpop.xlane.xlu0 %286
    %v288 = vrot.slane %v287, 4
    %v289 = vadd.f32 %v287, %v288
    %v290 = vrot.slane %v289, 2
    %v291 = vadd.f32 %v289, %v290
    %v292 = vrot.slane %v291, 1
    %v293 = vadd.f32 %v291, %v292
    %v294 = vsel %vm136, %v226, 0.0
    %v295 = vsel %vm136, %v230, 0.0
    %v296 = vadd.f32 %v294, %v295
    %v297 = vsel %vm136, %v234, 0.0
    %v298 = vadd.f32 %v296, %v297
    %v299 = vsel %vm136, %v238, 0.0
    %v300 = vadd.f32 %v298, %v299
    %v301 = vsel %vm136, %v242, 0.0
    %v302 = vadd.f32 %v300, %v301
    %v303 = vsel %vm136, %v246, 0.0
    %v304 = vadd.f32 %v302, %v303
    %v305 = vsel %vm136, %v250, 0.0
    %v306 = vadd.f32 %v304, %v305
    %v307 = vsel %vm136, %v254, 0.0
    %v308 = vadd.f32 %v306, %v307
    %309 = vadd.xlane.f32.xlu0 %v308
    %v310 = vpop.xlane.xlu0 %309
    %v311 = vrot.slane %v310, 4
    %v312 = vadd.f32 %v310, %v311
    %v313 = vrot.slane %v312, 2
    %v314 = vadd.f32 %v312, %v313
    %v315 = vrot.slane %v314, 1
    %v316 = vadd.f32 %v314, %v315
    %v317 = vmul.f32 %v293, 0.0009765625
    %v318 = vmul.f32 %v316, 0.0009765625
    %v319 = vadd.f32 %v317, 1e-05
    %v320 = vadd.f32 %v318, 1e-05
    %v321 = vrsqrt.pop %v319
    %v322 = vrsqrt.pop %v320
    %v323 = vld [vmem:[#allocation5] sm:$0xff]
    %v324 = vmul.f32 %v323, %v321
    %v325 = vmul.f32 %v323, %v322
    %v326 = vld [vmem:[#allocation7] sm:$0xff]
    %v327 = vmul.f32 %v183, %v324
    %v328 = vmul.f32 %v184, %v325
    %v329 = vsub.f32 %v326, %v327
    %v330 = vsub.f32 %v326, %v328
    %v331 = vmul.f32 %v52, %v324
    %v332 = vmul.f32 %v53, %v325
    %v333 = vadd.f32 %v331, %v329
    %v334 = vadd.f32 %v332, %v330
    %335 = vst [vmem:[#allocation8] sm:$0xff] %v333
    %336 = vst [vmem:[#allocation8 + $0x8] sm:$0xff] %v334
    // Predicated region
    $region26: #{tpu_custom_call.1} parent=1 // pred_check
      _
    $region27: #{tpu_custom_call.1} parent=1 // pred_check_branch
      %338 = sbr.rel (0) target = $region29
    $region28: #{tpu_custom_call.1} parent=1 // pred_region
      %s340 = ssub.s32 256, 256
      %341 = vsyncadd [#allocation4], %s340
      %s342 = sshll.u32 [#allocation8], 4
      %s343 = int_to_ptr.vmem [resolvable:$true] %s342
      %348 = dma.vmem_to_hbm [thread:$0]  %s343, 256, %s3, [#allocation4], 128, 128, 8
    $region29: #{tpu_custom_call.1} parent=1 // pred_fallthru
      _
    // Predicated region
    $region30: #{tpu_custom_call.1} parent=1 // pred_check
      _
    $region31: #{tpu_custom_call.1} parent=1 // pred_check_branch
      %350 = sbr.rel (0) target = $region33
    $region32: #{tpu_custom_call.1} parent=1 // pred_region
      %351 = dma.done [#allocation4], 256
    $region33: #{tpu_custom_call.1} parent=1 // pred_fallthru
      _
    %352 = vsyncpa [#allocation3], 1
    %353 = vsyncpa [#allocation6], 1
    %354 = vsyncpa [#allocation4], 1

</llo_original>
